<compile_context>
chip_gen: v7x
topology: tpu7x:2x2x1
jax: 0.10.0
libtpu: 0.0.40
codegen_flags: <defaults>
</compile_context>

<pallas_src>
import functools

import jax
import jax.numpy as jnp
from jax.experimental import pallas as pl
from jax.experimental.pallas import tpu as pltpu


# ---------------------------------------------------------------------------
# Host-side helpers: hardware budget, sublane fold, tile selection, weight prep
# ---------------------------------------------------------------------------

def _round_up(n, m):
    return -(-n // m) * m


def _tpu_config():
    """Per-generation (vmem_limit_bytes, block-budget bytes, split batch across cores)."""
    phys = None
    try:
        phys = int(pltpu.get_tpu_info().vmem_capacity_bytes)
    except Exception:
        phys = None
    kind = ""
    try:
        kind = jax.devices()[0].device_kind.lower()
    except Exception:
        pass
    looks_v7 = ("v7" in kind) or ("7x" in kind)
    if phys is None:
        phys = (64 << 20) if looks_v7 else (128 << 20)
    if looks_v7 or phys <= (64 << 20):
        # v7x-class: 64 MiB VMEM per TensorCore, 2 TCs share HBM -> split the batch.
        return 48 << 20, 40 << 20, True
    # v5e / v6e: 128 MiB physical VMEM; raise the default scoped limit (16/32 MiB) so
    # the picker can choose full-HW or multi-MiB blocks and stay at the HBM roofline.
    return 96 << 20, 64 << 20, False


def _pick_sublane_fold(C, HW):
    """Fold S spatial positions into the channel (sublane) axis when C is not a
    multiple of 8, so x blocks get full 8-sublane occupancy.  The fold is a free,
    contiguous reshape; its effect on the matmul is absorbed by repeating w12 rows."""
    if C % 8 == 0:
        return 1
    for s in (2, 4, 8):
        if (C * s) % 8 == 0 and HW % s == 0 and (HW // s) % 128 == 0:
            return s
    return 1


_MAX_THW_TILED = 8192   # lane cap per reduction step (keeps the unrolled VPU-add loop short)
_MIN_THW = 1024         # below this the per-(b,c)-row HBM DMA gets too fine-grained


def _largest_divisor_multiple_of(n, unit, cap):
    """Largest divisor of n that is a multiple of `unit` and <= cap (0 if none)."""
    t = (min(cap, n) // unit) * unit
    while t >= unit:
        if n % t == 0:
            return t
        t -= unit
    return 0


def _divisors_desc(n):
    return [d for d in range(n, 0, -1) if n % d == 0]


def _pick_tiles(B, Cf, HWf, hidden, npad, x_itemsize, budget, split_batch):
    """VMEM-budget-driven (TB, THW) selection.

    Footprint model: double-buffered x block (TB, ceil8(Cf), THW) + (conservatively
    double-buffered) weights + double-buffered (TB, npad) output + the (TB, Cf, 128)
    accumulator when HW is tiled.  Prefers a full-HW block (no reduction axis).
    """
    Cfp = _round_up(max(Cf, 1), 8)
    weight_bytes = 2 * 4 * (Cfp * hidden + hidden * npad + 8 * hidden + 8 * npad)

    # Batch-tile candidates: full B, or multiple-of-8 divisors (output sublane rule).
    cands = [d for d in _divisors_desc(B) if d == B or d % 8 == 0]
    if split_batch and B >= 16:
        halves = [d for d in cands if d <= B // 2]
        cands = halves + [d for d in cands if d > B // 2]   # prefer >=2 batch programs

    fallback = None
    for TB in cands:
        out_bytes = 2 * TB * npad * 4
        fixed = weight_bytes + out_bytes
        full_x = 2 * TB * Cfp * _round_up(HWf, 128) * x_itemsize
        if fixed + full_x <= budget:
            return TB, HWf                                   # whole-HW block, no k axis
        if HWf % 128 != 0:
            continue                                         # can't tile a non-128 HW
        acc_bytes = TB * Cfp * 128 * 4
        avail = budget - fixed - acc_bytes
        if avail <= 0:
            continue
        cap = min(avail // (2 * TB * Cfp * x_itemsize), _MAX_THW_TILED)
        thw = _largest_divisor_multiple_of(HWf, 128, cap)
        if thw >= min(_MIN_THW, HWf):
            return TB, thw
        if thw and fallback is None:
            fallback = (TB, thw)
    if fallback is not None:
        return fallback
    # Last resort: smallest legal batch tile, minimal lane tile (vmem_limit has headroom).
    tb = min(cands) if cands else B
    thw = 128 if HWf % 128 == 0 else HWf
    return tb, thw


def prepare_head_params(params, input_shape=None):
    """One-time weight fusion/padding (call at parameter-load time, not per forward).

    Exactness note: folding conv_reduce + fc2 across the pool (w12 = (fc2_w @ conv_w).T)
    relies on AdaptiveAvgPool((1,1)) sitting between two linear maps with no
    nonlinearity/BN in between, as in this module.
    """
    C = params["conv_w"].shape[1]
    hidden = params["fc2_w"].shape[0]
    num_classes = params["fc_out_w"].shape[0]

    w1 = params["conv_w"].reshape(-1, C)                      # (128, C) 1x1 conv weight
    w12 = jnp.transpose(params["fc2_w"] @ w1)                 # (C, hidden)
    b12 = (params["fc2_w"] @ params["conv_b"] + params["fc2_b"]).reshape(1, hidden)

    npad = max(128, _round_up(num_classes, 128))              # lane-dense class block
    w3 = jnp.zeros((hidden, npad), jnp.float32).at[:, :num_classes].set(
        jnp.transpose(params["fc_out_w"]))
    b3 = jnp.zeros((1, npad), jnp.float32).at[:, :num_classes].set(params["fc_out_b"])

    fold_s = 1
    if input_shape is not None:
        _, c_in, h, w = input_shape
        fold_s = _pick_sublane_fold(int(c_in), int(h) * int(w))
    w12_folded = jnp.repeat(w12, fold_s, axis=0) if fold_s > 1 else w12

    return {"w12_base": w12, "w12": w12_folded, "fold_s": fold_s, "b12": b12,
            "w3": w3, "b3": b3, "hidden": hidden, "npad": npad,
            "num_classes": num_classes, "in_channels": C}


# ---------------------------------------------------------------------------
# Kernels
# ---------------------------------------------------------------------------

def _pool_fc(pooled_sum, w12, b12, w3, b3, o_ref, inv_hw):
    """Shared finalize: scale sums to the mean, fused conv+fc2 matmul, ReLU, fc_out."""
    pooled = pooled_sum * inv_hw                                    # AdaptiveAvgPool(1,1)
    h = jnp.dot(pooled, w12, preferred_element_type=jnp.float32) + b12
    h = jnp.maximum(h, 0.0)                                         # ReLU
    # TODO(synk): dropout2 omitted -- identity in eval/inference mode.
    o_ref[...] = (jnp.dot(h, w3, preferred_element_type=jnp.float32) + b3).astype(o_ref.dtype)


def _head_kernel_full(x_ref, w12_ref, b12_ref, w3_ref, b3_ref, o_ref, *, inv_hw):
    # Whole (folded) HW is resident: one lane reduction, then the two tiny matmuls.
    pooled_sum = jnp.sum(x_ref[...], axis=-1, dtype=jnp.float32)    # (TB, Cf)
    _pool_fc(pooled_sum, w12_ref[...], b12_ref[...], w3_ref[...], b3_ref[...],
             o_ref, inv_hw)


def _head_kernel_tiled(x_ref, w12_ref, b12_ref, w3_ref, b3_ref, o_ref, acc_ref, *,
                       inv_hw, groups):
    k = pl.program_id(1)

    @pl.when(k == 0)
    def _():
        acc_ref[...] = jnp.zeros_like(acc_ref)

    # Lane-dense accumulation: add 128-lane slices of this HW tile with pure VPU ops
    # (no per-step cross-lane reduce, no lane-sparse accumulator read-modify-write).
    part = x_ref[:, :, 0:128].astype(jnp.float32)
    for g in range(1, groups):
        part = part + x_ref[:, :, g * 128:(g + 1) * 128].astype(jnp.float32)
    acc_ref[...] += part

    @pl.when(k == pl.num_programs(1) - 1)
    def _():
        pooled_sum = jnp.sum(acc_ref[...], axis=-1)                 # single cross-lane reduce
        _pool_fc(pooled_sum, w12_ref[...], b12_ref[...], w3_ref[...], b3_ref[...],
                 o_ref, inv_hw)


# ---------------------------------------------------------------------------
# Wrapper
# ---------------------------------------------------------------------------

def classification_head(x_nchw, params):
    """x_nchw: (B, C, H, W) float32/bfloat16.  `params` may be raw init_params(...)
    output or the result of prepare_head_params(...); preparing once keeps weight
    fusion/padding off the per-call critical path."""
    prepared = params if "w12" in params else prepare_head_params(params, x_nchw.shape)

    B, C, H, W = x_nchw.shape
    HW = H * W
    hidden = prepared["hidden"]
    npad = prepared["npad"]
    num_classes = prepared["num_classes"]

    # Sublane fold: (B, C, HW) -> (B, C*S, HW/S), a pure row-major (free) reshape.
    S = _pick_sublane_fold(C, HW)
    Cf, HWf = C * S, HW // S
    x = x_nchw.reshape(B, Cf, HWf)

    if S == prepared["fold_s"]:
        w12 = prepared["w12"]
    else:  # shape-mismatch fallback: re-derive the row-repeated fused weight
        w12 = prepared["w12_base"]
        if S > 1:
            w12 = jnp.repeat(w12, S, axis=0)
    b12, w3, b3 = prepared["b12"], prepared["w3"], prepared["b3"]

    vmem_limit, budget, split_batch = _tpu_config()
    TB, THW = _pick_tiles(B, Cf, HWf, hidden, npad, x.dtype.itemsize, budget, split_batch)
    num_k = HWf // THW
    inv_hw = 1.0 / float(HW)

    cost = pl.CostEstimate(
        flops=int(B * Cf * HWf + 2 * B * (Cf * hidden + hidden * npad)),
        transcendentals=0,
        bytes_accessed=int(B * Cf * HWf * x.dtype.itemsize
                           + 4 * (w12.size + b12.size + w3.size + b3.size)
                           + 4 * B * npad))
    cparams = pltpu.CompilerParams(
        dimension_semantics=("parallel", "arbitrary") if num_k > 1 else ("parallel",),
        vmem_limit_bytes=int(vmem_limit))

    def build(single_buffer_weights):
        # Grid-invariant weights don't need double-buffering.
        wkw = {"pipeline_mode": pl.Buffered(1)} if single_buffer_weights else {}
        if num_k > 1:
            grid = (B // TB, num_k)
            x_map = lambda i, k: (i, 0, k)
            w_map = lambda i, k: (0, 0)
            o_map = lambda i, k: (i, 0)
            kernel = functools.partial(_head_kernel_tiled, inv_hw=inv_hw, groups=THW // 128)
            scratch = [pltpu.VMEM((TB, Cf, 128), jnp.float32)]
        else:
            grid = (B // TB,)
            x_map = lambda i: (i, 0, 0)
            w_map = lambda i: (0, 0)
            o_map = lambda i: (i, 0)
            kernel = functools.partial(_head_kernel_full, inv_hw=inv_hw)
            scratch = []
        grid_spec = pltpu.PrefetchScalarGridSpec(
            num_scalar_prefetch=0,
            grid=grid,
            in_specs=[
                pl.BlockSpec((TB, Cf, THW), x_map),
                pl.BlockSpec((Cf, hidden), w_map, **wkw),
                pl.BlockSpec((1, hidden), w_map, **wkw),
                pl.BlockSpec((hidden, npad), w_map, **wkw),
                pl.BlockSpec((1, npad), w_map, **wkw),
            ],
            out_specs=pl.BlockSpec((TB, npad), o_map),
            scratch_shapes=scratch)
        return pl.pallas_call(
            kernel,
            out_shape=jax.ShapeDtypeStruct((B, npad), jnp.float32),
            grid_spec=grid_spec,
            compiler_params=cparams,
            cost_estimate=cost)

    try:
        out_padded = build(True)(x, w12, b12, w3, b3)
    except Exception:
        # If this Pallas build rejects pipeline_mode on BlockSpecs, fall back to
        # default double-buffered weights (identical semantics).
        out_padded = build(False)(x, w12, b12, w3, b3)

    return out_padded[:, :num_classes]


# ---------------------------------------------------------------------------
# Parameters / reference / test
# ---------------------------------------------------------------------------

def init_params(key, in_channels, num_classes, hidden_dim):
    ks = jax.random.split(key, 6)
    scale = 0.05
    return {
        "conv_w": scale * jax.random.normal(ks[0], (128, in_channels, 1, 1), jnp.float32),
        "conv_b": scale * jax.random.normal(ks[1], (128,), jnp.float32),
        "fc2_w": scale * jax.random.normal(ks[2], (hidden_dim, 128), jnp.float32),
        "fc2_b": scale * jax.random.normal(ks[3], (hidden_dim,), jnp.float32),
        "fc_out_w": scale * jax.random.normal(ks[4], (num_classes, hidden_dim), jnp.float32),
        "fc_out_b": scale * jax.random.normal(ks[5], (num_classes,), jnp.float32),
    }


def reference_forward(x_nchw, params):
    """Plain-JAX reference matching the PyTorch module (eval mode)."""
    w1 = params["conv_w"].reshape(128, -1)
    y = jnp.einsum("bchw,oc->bohw", x_nchw, w1) + params["conv_b"][None, :, None, None]
    pooled = jnp.mean(y, axis=(2, 3))                               # (B, 128)
    h = jnp.maximum(pooled @ params["fc2_w"].T + params["fc2_b"], 0.0)
    return h @ params["fc_out_w"].T + params["fc_out_b"]


if __name__ == "__main__":
    key = jax.random.PRNGKey(0)
    kx, kp = jax.random.split(key)

    B, C, H, W = 2, 4, 16, 16
    num_classes, hidden_dim = 10, 32

    x = jax.random.normal(kx, (B, C, H, W), jnp.float32)
    params = init_params(kp, C, num_classes, hidden_dim)

    prepared = prepare_head_params(params, x.shape)   # one-time weight fusion/padding
    out = classification_head(x, prepared)
    out = jax.block_until_ready(out)

    ref = reference_forward(x, params)
    assert out.shape == (B, num_classes)
    assert jnp.allclose(out, ref, atol=1e-4, rtol=1e-4), "mismatch vs reference"

    print("KERNEL_OK")
</pallas_src>

<mosaic_0001>
module attributes {stable_mosaic.version = 11 : i64} {
  func.func @_head_kernel_full(%arg0: i32, %arg1: memref<2x8x128xf32, #tpu.memory_space<vmem>>, %arg2: memref<8x32xf32, #tpu.memory_space<vmem>>, %arg3: memref<1x32xf32, #tpu.memory_space<vmem>>, %arg4: memref<32x128xf32, #tpu.memory_space<vmem>>, %arg5: memref<1x128xf32, #tpu.memory_space<vmem>>, %arg6: memref<2x128xf32, #tpu.memory_space<vmem>>) attributes {dimension_semantics = [#tpu.dimension_semantics<parallel>], iteration_bounds = array<i64: 1>, scalar_prefetch = 0 : i64, scratch_operands = 0 : i64, tpu.core_type = #tpu.core_type<tc>, window_params = [{transform_indices = @transform_0, window_bounds = array<i64: 2, 8, 128>}, {pipeline_mode = #tpu.pipeline_mode<synchronous>, transform_indices = @transform_1, window_bounds = array<i64: 8, 32>}, {pipeline_mode = #tpu.pipeline_mode<synchronous>, transform_indices = @transform_2, window_bounds = array<i64: 1, 32>}, {pipeline_mode = #tpu.pipeline_mode<synchronous>, transform_indices = @transform_3, window_bounds = array<i64: 32, 128>}, {pipeline_mode = #tpu.pipeline_mode<synchronous>, transform_indices = @transform_4, window_bounds = array<i64: 1, 128>}, {transform_indices = @transform_5, window_bounds = array<i64: 2, 128>}]} {
    %c0 = arith.constant 0 : index
    %c0_0 = arith.constant 0 : index
    %c0_1 = arith.constant 0 : index
    %0 = vector.load %arg1[%c0, %c0_0, %c0_1] : memref<2x8x128xf32, #tpu.memory_space<vmem>>, vector<2x8x128xf32>
    %cst = arith.constant dense<0.000000e+00> : vector<2x8xf32>
    %1 = vector.multi_reduction <add>, %0, %cst [2] : vector<2x8x128xf32> to vector<2x8xf32>
    %c0_2 = arith.constant 0 : index
    %c0_3 = arith.constant 0 : index
    %2 = vector.load %arg2[%c0_2, %c0_3] : memref<8x32xf32, #tpu.memory_space<vmem>>, vector<8x32xf32>
    %c0_4 = arith.constant 0 : index
    %c0_5 = arith.constant 0 : index
    %3 = vector.load %arg3[%c0_4, %c0_5] : memref<1x32xf32, #tpu.memory_space<vmem>>, vector<1x32xf32>
    %c0_6 = arith.constant 0 : index
    %c0_7 = arith.constant 0 : index
    %4 = vector.load %arg4[%c0_6, %c0_7] : memref<32x128xf32, #tpu.memory_space<vmem>>, vector<32x128xf32>
    %c0_8 = arith.constant 0 : index
    %c0_9 = arith.constant 0 : index
    %5 = vector.load %arg5[%c0_8, %c0_9] : memref<1x128xf32, #tpu.memory_space<vmem>>, vector<1x128xf32>
    %cst_10 = arith.constant 3.906250e-03 : f32
    %6 = vector.broadcast %cst_10 : f32 to vector<2x8xf32>
    %7 = arith.mulf %1, %6 : vector<2x8xf32>
    %cst_11 = arith.constant dense<0.000000e+00> : vector<2x32xf32>
    %8 = tpu.matmul %7, %2, %cst_11 {dimension_numbers = #tpu.dot_dimension_numbers<[1], [0], [0], [1], [0, 0, 1, 1], [], []>} : vector<2x8xf32>, vector<8x32xf32>, vector<2x32xf32> -> vector<2x32xf32>
    %9 = vector.broadcast %3 : vector<1x32xf32> to vector<2x32xf32>
    %10 = arith.addf %8, %9 : vector<2x32xf32>
    %cst_12 = arith.constant 0.000000e+00 : f32
    %11 = vector.broadcast %cst_12 : f32 to vector<2x32xf32>
    %12 = arith.maximumf %10, %11 : vector<2x32xf32>
    %cst_13 = arith.constant dense<0.000000e+00> : vector<2x128xf32>
    %13 = tpu.matmul %12, %4, %cst_13 {dimension_numbers = #tpu.dot_dimension_numbers<[1], [0], [0], [1], [0, 0, 1, 1], [], []>} : vector<2x32xf32>, vector<32x128xf32>, vector<2x128xf32> -> vector<2x128xf32>
    %14 = vector.broadcast %5 : vector<1x128xf32> to vector<2x128xf32>
    %15 = arith.addf %13, %14 : vector<2x128xf32>
    %c0_14 = arith.constant 0 : index
    %c0_15 = arith.constant 0 : index
    %16 = vector.load %arg6[%c0_14, %c0_15] : memref<2x128xf32, #tpu.memory_space<vmem>>, vector<2x128xf32>
    tpu.vector_store %arg6[%c0_14, %c0_15], %15 {strides = array<i32>} : memref<2x128xf32, #tpu.memory_space<vmem>>, vector<2x128xf32>,
    return
  }
  func.func @transform_0(%arg0: i32) -> (i32, i32, i32) {
    %c0_i32 = arith.constant 0 : i32
    %c0_i32_0 = arith.constant 0 : i32
    %c0_i32_1 = arith.constant 0 : i32
    return %arg0, %c0_i32, %c0_i32_0 : i32, i32, i32
  }
  func.func @transform_1(%arg0: i32) -> (i32, i32) {
    %c0_i32 = arith.constant 0 : i32
    %c0_i32_0 = arith.constant 0 : i32
    %c0_i32_1 = arith.constant 0 : i32
    return %c0_i32, %c0_i32_0 : i32, i32
  }
  func.func @transform_2(%arg0: i32) -> (i32, i32) {
    %c0_i32 = arith.constant 0 : i32
    %c0_i32_0 = arith.constant 0 : i32
    %c0_i32_1 = arith.constant 0 : i32
    return %c0_i32, %c0_i32_0 : i32, i32
  }
  func.func @transform_3(%arg0: i32) -> (i32, i32) {
    %c0_i32 = arith.constant 0 : i32
    %c0_i32_0 = arith.constant 0 : i32
    %c0_i32_1 = arith.constant 0 : i32
    return %c0_i32, %c0_i32_0 : i32, i32
  }
  func.func @transform_4(%arg0: i32) -> (i32, i32) {
    %c0_i32 = arith.constant 0 : i32
    %c0_i32_0 = arith.constant 0 : i32
    %c0_i32_1 = arith.constant 0 : i32
    return %c0_i32, %c0_i32_0 : i32, i32
  }
  func.func @transform_5(%arg0: i32) -> (i32, i32) {
    %c0_i32 = arith.constant 0 : i32
    %c0_i32_0 = arith.constant 0 : i32
    return %arg0, %c0_i32 : i32, i32
  }
}

module attributes {stable_mosaic.version = 11 : i64} {
  func.func @_head_kernel_full(%arg0: i32, %arg1: memref<2x8x128xf32, #tpu.memory_space<vmem>>, %arg2: memref<8x32xf32, #tpu.memory_space<vmem>>, %arg3: memref<1x32xf32, #tpu.memory_space<vmem>>, %arg4: memref<32x128xf32, #tpu.memory_space<vmem>>, %arg5: memref<1x128xf32, #tpu.memory_space<vmem>>, %arg6: memref<2x128xf32, #tpu.memory_space<vmem>>) attributes {dimension_semantics = [#tpu.dimension_semantics<parallel>], iteration_bounds = array<i64: 1>, scalar_prefetch = 0 : i64, scratch_operands = 0 : i64, tpu.core_type = #tpu.core_type<tc>, window_params = [{transform_indices = @transform_0, window_bounds = array<i64: 2, 8, 128>}, {pipeline_mode = #tpu.pipeline_mode<synchronous>, transform_indices = @transform_1, window_bounds = array<i64: 8, 32>}, {pipeline_mode = #tpu.pipeline_mode<synchronous>, transform_indices = @transform_2, window_bounds = array<i64: 1, 32>}, {pipeline_mode = #tpu.pipeline_mode<synchronous>, transform_indices = @transform_3, window_bounds = array<i64: 32, 128>}, {pipeline_mode = #tpu.pipeline_mode<synchronous>, transform_indices = @transform_4, window_bounds = array<i64: 1, 128>}, {transform_indices = @transform_5, window_bounds = array<i64: 2, 128>}]} {
    %c0 = arith.constant 0 : index
    %c0_0 = arith.constant 0 : index
    %c0_1 = arith.constant 0 : index
    %0 = vector.load %arg1[%c0, %c0_0, %c0_1] : memref<2x8x128xf32, #tpu.memory_space<vmem>>, vector<2x8x128xf32>
    %cst = arith.constant dense<0.000000e+00> : vector<2x8xf32>
    %1 = vector.multi_reduction <add>, %0, %cst [2] : vector<2x8x128xf32> to vector<2x8xf32>
    %c0_2 = arith.constant 0 : index
    %c0_3 = arith.constant 0 : index
    %2 = vector.load %arg2[%c0_2, %c0_3] : memref<8x32xf32, #tpu.memory_space<vmem>>, vector<8x32xf32>
    %c0_4 = arith.constant 0 : index
    %c0_5 = arith.constant 0 : index
    %3 = vector.load %arg3[%c0_4, %c0_5] : memref<1x32xf32, #tpu.memory_space<vmem>>, vector<1x32xf32>
    %c0_6 = arith.constant 0 : index
    %c0_7 = arith.constant 0 : index
    %4 = vector.load %arg4[%c0_6, %c0_7] : memref<32x128xf32, #tpu.memory_space<vmem>>, vector<32x128xf32>
    %c0_8 = arith.constant 0 : index
    %c0_9 = arith.constant 0 : index
    %5 = vector.load %arg5[%c0_8, %c0_9] : memref<1x128xf32, #tpu.memory_space<vmem>>, vector<1x128xf32>
    %cst_10 = arith.constant 3.906250e-03 : f32
    %6 = vector.broadcast %cst_10 : f32 to vector<2x8xf32>
    %7 = arith.mulf %1, %6 : vector<2x8xf32>
    %cst_11 = arith.constant dense<0.000000e+00> : vector<2x32xf32>
    %8 = tpu.matmul %7, %2, %cst_11 {dimension_numbers = #tpu.dot_dimension_numbers<[1], [0], [0], [1], [0, 0, 1, 1], [], []>} : vector<2x8xf32>, vector<8x32xf32>, vector<2x32xf32> -> vector<2x32xf32>
    %9 = vector.broadcast %3 : vector<1x32xf32> to vector<2x32xf32>
    %10 = arith.addf %8, %9 : vector<2x32xf32>
    %cst_12 = arith.constant 0.000000e+00 : f32
    %11 = vector.broadcast %cst_12 : f32 to vector<2x32xf32>
    %12 = arith.maximumf %10, %11 : vector<2x32xf32>
    %cst_13 = arith.constant dense<0.000000e+00> : vector<2x128xf32>
    %13 = tpu.matmul %12, %4, %cst_13 {dimension_numbers = #tpu.dot_dimension_numbers<[1], [0], [0], [1], [0, 0, 1, 1], [], []>} : vector<2x32xf32>, vector<32x128xf32>, vector<2x128xf32> -> vector<2x128xf32>
    %14 = vector.broadcast %5 : vector<1x128xf32> to vector<2x128xf32>
    %15 = arith.addf %13, %14 : vector<2x128xf32>
    %c0_14 = arith.constant 0 : index
    %c0_15 = arith.constant 0 : index
    %16 = vector.load %arg6[%c0_14, %c0_15] : memref<2x128xf32, #tpu.memory_space<vmem>>, vector<2x128xf32>
    tpu.vector_store %arg6[%c0_14, %c0_15], %15 {strides = array<i32>} : memref<2x128xf32, #tpu.memory_space<vmem>>, vector<2x128xf32>,
    return
  }
  func.func @transform_0(%arg0: i32) -> (i32, i32, i32) {
    %c0_i32 = arith.constant 0 : i32
    %c0_i32_0 = arith.constant 0 : i32
    %c0_i32_1 = arith.constant 0 : i32
    return %arg0, %c0_i32, %c0_i32_0 : i32, i32, i32
  }
  func.func @transform_1(%arg0: i32) -> (i32, i32) {
    %c0_i32 = arith.constant 0 : i32
    %c0_i32_0 = arith.constant 0 : i32
    %c0_i32_1 = arith.constant 0 : i32
    return %c0_i32, %c0_i32_0 : i32, i32
  }
  func.func @transform_2(%arg0: i32) -> (i32, i32) {
    %c0_i32 = arith.constant 0 : i32
    %c0_i32_0 = arith.constant 0 : i32
    %c0_i32_1 = arith.constant 0 : i32
    return %c0_i32, %c0_i32_0 : i32, i32
  }
  func.func @transform_3(%arg0: i32) -> (i32, i32) {
    %c0_i32 = arith.constant 0 : i32
    %c0_i32_0 = arith.constant 0 : i32
    %c0_i32_1 = arith.constant 0 : i32
    return %c0_i32, %c0_i32_0 : i32, i32
  }
  func.func @transform_4(%arg0: i32) -> (i32, i32) {
    %c0_i32 = arith.constant 0 : i32
    %c0_i32_0 = arith.constant 0 : i32
    %c0_i32_1 = arith.constant 0 : i32
    return %c0_i32, %c0_i32_0 : i32, i32
  }
  func.func @transform_5(%arg0: i32) -> (i32, i32) {
    %c0_i32 = arith.constant 0 : i32
    %c0_i32_0 = arith.constant 0 : i32
    return %arg0, %c0_i32 : i32, i32
  }
}

</mosaic_0001>

<llo_original>
// kernel: tpu_custom_call.1
$region0: #{tpu_custom_call.1}
  #allocation0 [shape = 'u32[]', space=smem, size = 0x4, offset = 0x4, fixed_abs, tag = 'smem constant byte address 0x4 - core index']
  #allocation1 [shape = 'u32[144,128]{1,0:T(1,128)}', space=vmem, size = 0x12000, scoped, tag = 'internal scratch']
  %s0 = inlined_call_operand.hbm [shape: f32[2,8,128], index: 0, kind: input, shape index: {}]
  %s1 = inlined_call_operand.hbm [shape: f32[8,32], index: 1, kind: input, shape index: {}]
  %s2 = inlined_call_operand.hbm [shape: f32[1,32], index: 2, kind: input, shape index: {}]
  %s3 = inlined_call_operand.hbm [shape: f32[32,128], index: 3, kind: input, shape index: {}]
  %s4 = inlined_call_operand.hbm [shape: f32[1,128], index: 4, kind: input, shape index: {}]
  %s5 = inlined_call_operand.hbm [shape: f32[2,128], index: 5, kind: output, shape index: {}]
  %s6 = sld [smem:[#allocation0]]
  $region50: #{tpu_custom_call.1} parent=0
    _
  %s8 = ssub.s32 1, %s6
  %s9 = scalar_select 0, %s8, %s6
  $region1: #{tpu_custom_call.1} parent=0
    #allocation2 [shape = 'u8[8192]{0}', space=vmem, size = 0x2000, scoped, tag = 'input window, operand 0, single buffered']
    #allocation3 [shape = 's32[1]{0}', space=sflag, size = 0x4, scoped, tag = 'scoped memory for tpu_custom_call.1']
    #allocation4 [shape = 's32[1]{0}', space=sflag, size = 0x4, scoped, tag = 'scoped memory for tpu_custom_call.1']
    #allocation5 [shape = 'u8[4096]{0}', space=vmem, size = 0x1000, scoped, tag = 'input window, operand 1, single buffered']
    #allocation6 [shape = 's32[1]{0}', space=sflag, size = 0x4, scoped, tag = 'scoped memory for tpu_custom_call.1']
    #allocation7 [shape = 'u8[512]{0}', space=vmem, size = 0x400, scoped, tag = 'input window, operand 2, single buffered']
    #allocation8 [shape = 'u8[16384]{0}', space=vmem, size = 0x4000, scoped, tag = 'input window, operand 3, single buffered']
    #allocation9 [shape = 's32[1]{0}', space=sflag, size = 0x4, scoped, tag = 'scoped memory for tpu_custom_call.1']
    #allocation10 [shape = 'u8[512]{0}', space=vmem, size = 0x400, scoped, tag = 'input window, operand 4, single buffered']
    #allocation11 [shape = 'u8[1024]{0}', space=vmem, size = 0x400, scoped, tag = 'output window, operand 0, single buffered']
    %10 = vsyncpa [#allocation3], 0
    %11 = vsyncpa [#allocation6], 0
    %12 = vsyncpa [#allocation9], 0
    %13 = vsyncpa [#allocation4], 0
    // Predicated region
    $region2: #{tpu_custom_call.1} parent=1 // pred_check
      _
    $region3: #{tpu_custom_call.1} parent=1 // pred_check_branch
      %15 = sbr.rel (0) target = $region5
    $region4: #{tpu_custom_call.1} parent=1 // pred_region
      %s17 = ssub.s32 256, 256
      %18 = vsyncadd [#allocation3], %s17
      %s19 = sshll.u32 [#allocation2], 4
      %s20 = int_to_ptr.vmem [resolvable:$true] %s19
      %25 = dma.hbm_to_vmem [thread:$0]  %s0, 256, %s20, [#allocation3], 128, 128, 8
    $region5: #{tpu_custom_call.1} parent=1 // pred_fallthru
      _
    // Predicated region
    $region6: #{tpu_custom_call.1} parent=1 // pred_check
      _
    $region7: #{tpu_custom_call.1} parent=1 // pred_check_branch
      %27 = sbr.rel (0) target = $region9
    $region8: #{tpu_custom_call.1} parent=1 // pred_region
      %s29 = ssub.s32 128, 128
      %30 = vsyncadd [#allocation6], %s29
      %s32 = sshll.u32 [#allocation5], 4
      %s33 = int_to_ptr.vmem [resolvable:$true] %s32
      %35 = dma.hbm_to_vmem [thread:$0]  %s1, 128, %s33, [#allocation6]
    $region9: #{tpu_custom_call.1} parent=1 // pred_fallthru
      _
    // Predicated region
    $region10: #{tpu_custom_call.1} parent=1 // pred_check
      _
    $region11: #{tpu_custom_call.1} parent=1 // pred_check_branch
      %37 = sbr.rel (0) target = $region13
    $region12: #{tpu_custom_call.1} parent=1 // pred_region
      %s39 = ssub.s32 16, 16
      %40 = vsyncadd [#allocation6], %s39
      %s42 = sshll.u32 [#allocation7], 4
      %s43 = int_to_ptr.vmem [resolvable:$true] %s42
      %45 = dma.hbm_to_vmem [thread:$0]  %s2, 16, %s43, [#allocation6]
    $region13: #{tpu_custom_call.1} parent=1 // pred_fallthru
      _
    // Predicated region
    $region14: #{tpu_custom_call.1} parent=1 // pred_check
      _
    $region15: #{tpu_custom_call.1} parent=1 // pred_check_branch
      %47 = sbr.rel (0) target = $region17
    $region16: #{tpu_custom_call.1} parent=1 // pred_region
      %s49 = ssub.s32 512, 512
      %50 = vsyncadd [#allocation9], %s49
      %s51 = sshll.u32 [#allocation8], 4
      %s52 = int_to_ptr.vmem [resolvable:$true] %s51
      %57 = dma.hbm_to_vmem [thread:$0]  %s3, 512, %s52, [#allocation9], 128, 128, 8
    $region17: #{tpu_custom_call.1} parent=1 // pred_fallthru
      _
    // Predicated region
    $region18: #{tpu_custom_call.1} parent=1 // pred_check
      _
    $region19: #{tpu_custom_call.1} parent=1 // pred_check_branch
      %59 = sbr.rel (0) target = $region21
    $region20: #{tpu_custom_call.1} parent=1 // pred_region
      %s61 = ssub.s32 16, 16
      %62 = vsyncadd [#allocation9], %s61
      %s64 = sshll.u32 [#allocation10], 4
      %s65 = int_to_ptr.vmem [resolvable:$true] %s64
      %67 = dma.hbm_to_vmem [thread:$0]  %s4, 16, %s65, [#allocation9]
    $region21: #{tpu_custom_call.1} parent=1 // pred_fallthru
      _
    // Predicated region
    $region22: #{tpu_custom_call.1} parent=1 // pred_check
      _
    $region23: #{tpu_custom_call.1} parent=1 // pred_check_branch
      %69 = sbr.rel (0) target = $region25
    $region24: #{tpu_custom_call.1} parent=1 // pred_region
      %70 = dma.done [#allocation3], 256
    $region25: #{tpu_custom_call.1} parent=1 // pred_fallthru
      _
    // Predicated region
    $region26: #{tpu_custom_call.1} parent=1 // pred_check
      _
    $region27: #{tpu_custom_call.1} parent=1 // pred_check_branch
      %72 = sbr.rel (0) target = $region29
    $region28: #{tpu_custom_call.1} parent=1 // pred_region
      %73 = dma.done [#allocation6], 128
    $region29: #{tpu_custom_call.1} parent=1 // pred_fallthru
      _
    // Predicated region
    $region30: #{tpu_custom_call.1} parent=1 // pred_check
      _
    $region31: #{tpu_custom_call.1} parent=1 // pred_check_branch
      %75 = sbr.rel (0) target = $region33
    $region32: #{tpu_custom_call.1} parent=1 // pred_region
      %76 = dma.done [#allocation6], 16
    $region33: #{tpu_custom_call.1} parent=1 // pred_fallthru
      _
    // Predicated region
    $region34: #{tpu_custom_call.1} parent=1 // pred_check
      _
    $region35: #{tpu_custom_call.1} parent=1 // pred_check_branch
      %78 = sbr.rel (0) target = $region37
    $region36: #{tpu_custom_call.1} parent=1 // pred_region
      %79 = dma.done [#allocation9], 512
    $region37: #{tpu_custom_call.1} parent=1 // pred_fallthru
      _
    // Predicated region
    $region38: #{tpu_custom_call.1} parent=1 // pred_check
      _
    $region39: #{tpu_custom_call.1} parent=1 // pred_check_branch
      %81 = sbr.rel (0) target = $region41
    $region40: #{tpu_custom_call.1} parent=1 // pred_region
      %82 = dma.done [#allocation9], 16
    $region41: #{tpu_custom_call.1} parent=1 // pred_fallthru
      _
    %v83 = vld [vmem:[#allocation2] sm:$0xff]
    %v84 = vld [vmem:[#allocation2 + $0x8] sm:$0xff]
    %85 = vadd.xlane.f32.xlu0 %v83
    %v86 = vpop.xlane.xlu0 %85
    %87 = vadd.xlane.f32.xlu0 %v84
    %v88 = vpop.xlane.xlu0 %87
    %v89 = vld [vmem:[#allocation5] sm:$0xff]
    %v90 = vld [vmem:[#allocation7] sm:$0x1]
    %v91 = vld [vmem:[#allocation8] sm:$0xff]
    %v92 = vld [vmem:[#allocation8 + $0x8] sm:$0xff]
    %v93 = vld [vmem:[#allocation8 + $0x10] sm:$0xff]
    %v94 = vld [vmem:[#allocation8 + $0x18] sm:$0xff]
    %v95 = vld [vmem:[#allocation10] sm:$0x1]
    %v96 = vmul.f32 %v86, 0.00390625
    %v97 = vmul.f32 %v88, 0.00390625
    %v99 = vlaneseq
    %v100 = vshrl.u32 %v99, 7
    %v101 = vsub.s32 0, %v100
    %v102 = vrot.slane %v90, %v101
    %v106 = vlaneseq
    %v107 = vand.u32 %v106, 127
    %v108 = vlaneseq
    %v109 = vshrl.u32 %v108, 7
    %v110 = vsub.s32 %v107, %v109
    %v111 = vrot.slane %v96, %v110
    %v112 = vlaneseq
    %v113 = vshrl.u32 %v112, 7
    %v114 = vsub.s32 %v107, %v113
    %v115 = vrot.slane %v97, %v114
    %vm116 = vcmask 1041409
    %v117 = vsel %vm116, %v115, %v111
    %vm118 = vcmask 64512
    %v119 = vsel %vm118, %v117, 0
    %121 = vmatprep.subr.mxu0 0.0
    %122 = vmatpush1.msra.mxu0 %v89
    %123 = vmatprep.subr.mxu0 0.0
    %124 = vmatpush1.msra.mxu0 0.0
    %125 = vmatprep.subr.mxu0 0.0
    %126 = vmatpush1.msra.mxu0 0.0
    %127 = vmatprep.subr.mxu0 0.0
    %128 = vmatpush1.msra.mxu0 0.0
    %129 = vmatprep.subr.mxu0 0.0
    %130 = vmatpush1.msra.mxu0 0.0
    %131 = vmatprep.subr.mxu0 0.0
    %132 = vmatpush1.msra.mxu0 0.0
    %133 = vmatprep.subr.mxu0 0.0
    %134 = vmatpush1.msra.mxu0 0.0
    %135 = vmatprep.subr.mxu0 0.0
    %136 = vmatpush1.msra.mxu0 0.0
    %137 = vmatprep.subr.mxu0 0.0
    %138 = vmatpush1.msra.mxu0 0.0
    %139 = vmatprep.subr.mxu0 0.0
    %140 = vmatpush1.msra.mxu0 0.0
    %141 = vmatprep.subr.mxu0 0.0
    %142 = vmatpush1.msra.mxu0 0.0
    %143 = vmatprep.subr.mxu0 0.0
    %144 = vmatpush1.msra.mxu0 0.0
    %145 = vmatprep.subr.mxu0 0.0
    %146 = vmatpush1.msra.mxu0 0.0
    %147 = vmatprep.subr.mxu0 0.0
    %148 = vmatpush1.msra.mxu0 0.0
    %149 = vmatprep.subr.mxu0 0.0
    %150 = vmatpush1.msra.mxu0 0.0
    %151 = vmatprep.subr.mxu0 0.0
    %152 = vmatpush1.msra.mxu0 0.0
    %153 = vmatprep.subr.mxu0 0.0
    %154 = vmatpush1.msra.mxu0 0.0
    %155 = vmatprep.subr.mxu0 0.0
    %156 = vmatpush1.msra.mxu0 0.0
    %157 = vmatprep.subr.mxu0 0.0
    %158 = vmatpush1.msra.mxu0 0.0
    %159 = vmatprep.subr.mxu0 0.0
    %160 = vmatpush1.msra.mxu0 0.0
    %161 = vmatprep.subr.mxu0 0.0
    %162 = vmatpush1.msra.mxu0 0.0
    %163 = vmatprep.subr.mxu0 0.0
    %164 = vmatpush1.msra.mxu0 0.0
    %165 = vmatprep.subr.mxu0 0.0
    %166 = vmatpush1.msra.mxu0 0.0
    %167 = vmatprep.subr.mxu0 0.0
    %168 = vmatpush1.msra.mxu0 0.0
    %169 = vmatprep.subr.mxu0 0.0
    %170 = vmatpush1.msra.mxu0 0.0
    %171 = vmatprep.subr.mxu0 0.0
    %172 = vmatpush1.msra.mxu0 0.0
    %173 = vmatprep.subr.mxu0 0.0
    %174 = vmatpush1.msra.mxu0 0.0
    %175 = vmatprep.subr.mxu0 0.0
    %176 = vmatpush1.msra.mxu0 0.0
    %177 = vmatprep.subr.mxu0 0.0
    %178 = vmatpush1.msra.mxu0 0.0
    %179 = vmatprep.subr.mxu0 0.0
    %180 = vmatpush1.msra.mxu0 0.0
    %181 = vmatprep.subr.mxu0 0.0
    %182 = vmatpush1.msra.mxu0 0.0
    %183 = vmatprep.subr.mxu0 0.0
    %184 = vmatpush1.msra.mxu0 0.0
    %185 = vmatprep.mubr.f32.mxu0 0.0
    %186 = vmatmul.mubr.f32.gmra.mrb[0].mxu0 %v119
    %v187 = vpop.f32.mrb[0].mxu0
    %v188 = vadd.f32 %v102, %v187
    %v189 = vpop.f32.mrb[0].mxu0
    %190 = vdwg.mxu0
    %v191 = vmax.f32 %v188, 0.0
    %v193 = vlaneseq
    %v194 = vshrl.u32 %v193, 7
    %v195 = vsub.s32 0, %v194
    %v196 = vrot.slane %v95, %v195
    %vm198 = vcmask 261120
    %v200 = vsel %vm198, %v191, 0
    %202 = vmatprep.subr.mxu0 0.0
    %203 = vmatpush1.msra.mxu0 %v91
    %204 = vmatprep.subr.mxu0 0.0
    %205 = vmatpush1.msra.mxu0 %v92
    %206 = vmatprep.subr.mxu0 0.0
    %207 = vmatpush1.msra.mxu0 %v93
    %208 = vmatprep.subr.mxu0 0.0
    %209 = vmatpush1.msra.mxu0 %v94
    %210 = vmatprep.subr.mxu0 0.0
    %211 = vmatpush1.msra.mxu0 0.0
    %212 = vmatprep.subr.mxu0 0.0
    %213 = vmatpush1.msra.mxu0 0.0
    %214 = vmatprep.subr.mxu0 0.0
    %215 = vmatpush1.msra.mxu0 0.0
    %216 = vmatprep.subr.mxu0 0.0
    %217 = vmatpush1.msra.mxu0 0.0
    %218 = vmatprep.subr.mxu0 0.0
    %219 = vmatpush1.msra.mxu0 0.0
    %220 = vmatprep.subr.mxu0 0.0
    %221 = vmatpush1.msra.mxu0 0.0
    %222 = vmatprep.subr.mxu0 0.0
    %223 = vmatpush1.msra.mxu0 0.0
    %224 = vmatprep.subr.mxu0 0.0
    %225 = vmatpush1.msra.mxu0 0.0
    %226 = vmatprep.subr.mxu0 0.0
    %227 = vmatpush1.msra.mxu0 0.0
    %228 = vmatprep.subr.mxu0 0.0
    %229 = vmatpush1.msra.mxu0 0.0
    %230 = vmatprep.subr.mxu0 0.0
    %231 = vmatpush1.msra.mxu0 0.0
    %232 = vmatprep.subr.mxu0 0.0
    %233 = vmatpush1.msra.mxu0 0.0
    %234 = vmatprep.subr.mxu0 0.0
    %235 = vmatpush1.msra.mxu0 0.0
    %236 = vmatprep.subr.mxu0 0.0
    %237 = vmatpush1.msra.mxu0 0.0
    %238 = vmatprep.subr.mxu0 0.0
    %239 = vmatpush1.msra.mxu0 0.0
    %240 = vmatprep.subr.mxu0 0.0
    %241 = vmatpush1.msra.mxu0 0.0
    %242 = vmatprep.subr.mxu0 0.0
    %243 = vmatpush1.msra.mxu0 0.0
    %244 = vmatprep.subr.mxu0 0.0
    %245 = vmatpush1.msra.mxu0 0.0
    %246 = vmatprep.subr.mxu0 0.0
    %247 = vmatpush1.msra.mxu0 0.0
    %248 = vmatprep.subr.mxu0 0.0
    %249 = vmatpush1.msra.mxu0 0.0
    %250 = vmatprep.subr.mxu0 0.0
    %251 = vmatpush1.msra.mxu0 0.0
    %252 = vmatprep.subr.mxu0 0.0
    %253 = vmatpush1.msra.mxu0 0.0
    %254 = vmatprep.subr.mxu0 0.0
    %255 = vmatpush1.msra.mxu0 0.0
    %256 = vmatprep.subr.mxu0 0.0
    %257 = vmatpush1.msra.mxu0 0.0
    %258 = vmatprep.subr.mxu0 0.0
    %259 = vmatpush1.msra.mxu0 0.0
    %260 = vmatprep.subr.mxu0 0.0
    %261 = vmatpush1.msra.mxu0 0.0
    %262 = vmatprep.subr.mxu0 0.0
    %263 = vmatpush1.msra.mxu0 0.0
    %264 = vmatprep.subr.mxu0 0.0
    %265 = vmatpush1.msra.mxu0 0.0
    %266 = vmatprep.mubr.f32.mxu0 0.0
    %267 = vmatmul.mubr.f32.gmra.mrb[0].mxu0 %v200
    %v268 = vpop.f32.mrb[0].mxu0
    %v269 = vadd.f32 %v196, %v268
    %v270 = vpop.f32.mrb[0].mxu0
    %271 = vdwg.mxu0
    %272 = vst [vmem:[#allocation11] sm:$0x3] %v269
    // Predicated region
    $region42: #{tpu_custom_call.1} parent=1 // pred_check
      _
    $region43: #{tpu_custom_call.1} parent=1 // pred_check_branch
      %274 = sbr.rel (0) target = $region45
    $region44: #{tpu_custom_call.1} parent=1 // pred_region
      %s276 = ssub.s32 32, 32
      %277 = vsyncadd [#allocation4], %s276
      %s279 = sshll.u32 [#allocation11], 4
      %s280 = int_to_ptr.vmem [resolvable:$true] %s279
      %282 = dma.vmem_to_hbm [thread:$0]  %s280, 32, %s5, [#allocation4]
    $region45: #{tpu_custom_call.1} parent=1 // pred_fallthru
      _
    // Predicated region
    $region46: #{tpu_custom_call.1} parent=1 // pred_check
      _
    $region47: #{tpu_custom_call.1} parent=1 // pred_check_branch
      %284 = sbr.rel (0) target = $region49
    $region48: #{tpu_custom_call.1} parent=1 // pred_region
      %285 = dma.done [#allocation4], 32
    $region49: #{tpu_custom_call.1} parent=1 // pred_fallthru
      _
    %286 = vsyncpa [#allocation3], 1
    %287 = vsyncpa [#allocation6], 1
    %288 = vsyncpa [#allocation9], 1
    %289 = vsyncpa [#allocation4], 1

// kernel: tpu_custom_call.1
$region0: #{tpu_custom_call.1}
  #allocation0 [shape = 'u32[]', space=smem, size = 0x4, offset = 0x4, fixed_abs, tag = 'smem constant byte address 0x4 - core index']
  #allocation1 [shape = 'u32[144,128]{1,0:T(1,128)}', space=vmem, size = 0x12000, scoped, tag = 'internal scratch']
  %s0 = inlined_call_operand.hbm [shape: f32[2,8,128], index: 0, kind: input, shape index: {}]
  %s1 = inlined_call_operand.hbm [shape: f32[8,32], index: 1, kind: input, shape index: {}]
  %s2 = inlined_call_operand.hbm [shape: f32[1,32], index: 2, kind: input, shape index: {}]
  %s3 = inlined_call_operand.hbm [shape: f32[32,128], index: 3, kind: input, shape index: {}]
  %s4 = inlined_call_operand.hbm [shape: f32[1,128], index: 4, kind: input, shape index: {}]
  %s5 = inlined_call_operand.hbm [shape: f32[2,128], index: 5, kind: output, shape index: {}]
  %s6 = sld [smem:[#allocation0]]
  $region50: #{tpu_custom_call.1} parent=0
    _
  %s8 = ssub.s32 1, %s6
  %s9 = scalar_select 0, %s8, %s6
  $region1: #{tpu_custom_call.1} parent=0
    #allocation2 [shape = 'u8[8192]{0}', space=vmem, size = 0x2000, scoped, tag = 'input window, operand 0, single buffered']
    #allocation3 [shape = 's32[1]{0}', space=sflag, size = 0x4, scoped, tag = 'scoped memory for tpu_custom_call.1']
    #allocation4 [shape = 's32[1]{0}', space=sflag, size = 0x4, scoped, tag = 'scoped memory for tpu_custom_call.1']
    #allocation5 [shape = 'u8[4096]{0}', space=vmem, size = 0x1000, scoped, tag = 'input window, operand 1, single buffered']
    #allocation6 [shape = 's32[1]{0}', space=sflag, size = 0x4, scoped, tag = 'scoped memory for tpu_custom_call.1']
    #allocation7 [shape = 'u8[512]{0}', space=vmem, size = 0x400, scoped, tag = 'input window, operand 2, single buffered']
    #allocation8 [shape = 'u8[16384]{0}', space=vmem, size = 0x4000, scoped, tag = 'input window, operand 3, single buffered']
    #allocation9 [shape = 's32[1]{0}', space=sflag, size = 0x4, scoped, tag = 'scoped memory for tpu_custom_call.1']
    #allocation10 [shape = 'u8[512]{0}', space=vmem, size = 0x400, scoped, tag = 'input window, operand 4, single buffered']
    #allocation11 [shape = 'u8[1024]{0}', space=vmem, size = 0x400, scoped, tag = 'output window, operand 0, single buffered']
    %10 = vsyncpa [#allocation3], 0
    %11 = vsyncpa [#allocation6], 0
    %12 = vsyncpa [#allocation9], 0
    %13 = vsyncpa [#allocation4], 0
    // Predicated region
    $region2: #{tpu_custom_call.1} parent=1 // pred_check
      _
    $region3: #{tpu_custom_call.1} parent=1 // pred_check_branch
      %15 = sbr.rel (0) target = $region5
    $region4: #{tpu_custom_call.1} parent=1 // pred_region
      %s17 = ssub.s32 256, 256
      %18 = vsyncadd [#allocation3], %s17
      %s19 = sshll.u32 [#allocation2], 4
      %s20 = int_to_ptr.vmem [resolvable:$true] %s19
      %25 = dma.hbm_to_vmem [thread:$0]  %s0, 256, %s20, [#allocation3], 128, 128, 8
    $region5: #{tpu_custom_call.1} parent=1 // pred_fallthru
      _
    // Predicated region
    $region6: #{tpu_custom_call.1} parent=1 // pred_check
      _
    $region7: #{tpu_custom_call.1} parent=1 // pred_check_branch
      %27 = sbr.rel (0) target = $region9
    $region8: #{tpu_custom_call.1} parent=1 // pred_region
      %s29 = ssub.s32 128, 128
      %30 = vsyncadd [#allocation6], %s29
      %s32 = sshll.u32 [#allocation5], 4
      %s33 = int_to_ptr.vmem [resolvable:$true] %s32
      %35 = dma.hbm_to_vmem [thread:$0]  %s1, 128, %s33, [#allocation6]
    $region9: #{tpu_custom_call.1} parent=1 // pred_fallthru
      _
    // Predicated region
    $region10: #{tpu_custom_call.1} parent=1 // pred_check
      _
    $region11: #{tpu_custom_call.1} parent=1 // pred_check_branch
      %37 = sbr.rel (0) target = $region13
    $region12: #{tpu_custom_call.1} parent=1 // pred_region
      %s39 = ssub.s32 16, 16
      %40 = vsyncadd [#allocation6], %s39
      %s42 = sshll.u32 [#allocation7], 4
      %s43 = int_to_ptr.vmem [resolvable:$true] %s42
      %45 = dma.hbm_to_vmem [thread:$0]  %s2, 16, %s43, [#allocation6]
    $region13: #{tpu_custom_call.1} parent=1 // pred_fallthru
      _
    // Predicated region
    $region14: #{tpu_custom_call.1} parent=1 // pred_check
      _
    $region15: #{tpu_custom_call.1} parent=1 // pred_check_branch
      %47 = sbr.rel (0) target = $region17
    $region16: #{tpu_custom_call.1} parent=1 // pred_region
      %s49 = ssub.s32 512, 512
      %50 = vsyncadd [#allocation9], %s49
      %s51 = sshll.u32 [#allocation8], 4
      %s52 = int_to_ptr.vmem [resolvable:$true] %s51
      %57 = dma.hbm_to_vmem [thread:$0]  %s3, 512, %s52, [#allocation9], 128, 128, 8
    $region17: #{tpu_custom_call.1} parent=1 // pred_fallthru
      _
    // Predicated region
    $region18: #{tpu_custom_call.1} parent=1 // pred_check
      _
    $region19: #{tpu_custom_call.1} parent=1 // pred_check_branch
      %59 = sbr.rel (0) target = $region21
    $region20: #{tpu_custom_call.1} parent=1 // pred_region
      %s61 = ssub.s32 16, 16
      %62 = vsyncadd [#allocation9], %s61
      %s64 = sshll.u32 [#allocation10], 4
      %s65 = int_to_ptr.vmem [resolvable:$true] %s64
      %67 = dma.hbm_to_vmem [thread:$0]  %s4, 16, %s65, [#allocation9]
    $region21: #{tpu_custom_call.1} parent=1 // pred_fallthru
      _
    // Predicated region
    $region22: #{tpu_custom_call.1} parent=1 // pred_check
      _
    $region23: #{tpu_custom_call.1} parent=1 // pred_check_branch
      %69 = sbr.rel (0) target = $region25
    $region24: #{tpu_custom_call.1} parent=1 // pred_region
      %70 = dma.done [#allocation3], 256
    $region25: #{tpu_custom_call.1} parent=1 // pred_fallthru
      _
    // Predicated region
    $region26: #{tpu_custom_call.1} parent=1 // pred_check
      _
    $region27: #{tpu_custom_call.1} parent=1 // pred_check_branch
      %72 = sbr.rel (0) target = $region29
    $region28: #{tpu_custom_call.1} parent=1 // pred_region
      %73 = dma.done [#allocation6], 128
    $region29: #{tpu_custom_call.1} parent=1 // pred_fallthru
      _
    // Predicated region
    $region30: #{tpu_custom_call.1} parent=1 // pred_check
      _
    $region31: #{tpu_custom_call.1} parent=1 // pred_check_branch
      %75 = sbr.rel (0) target = $region33
    $region32: #{tpu_custom_call.1} parent=1 // pred_region
      %76 = dma.done [#allocation6], 16
    $region33: #{tpu_custom_call.1} parent=1 // pred_fallthru
      _
    // Predicated region
    $region34: #{tpu_custom_call.1} parent=1 // pred_check
      _
    $region35: #{tpu_custom_call.1} parent=1 // pred_check_branch
      %78 = sbr.rel (0) target = $region37
    $region36: #{tpu_custom_call.1} parent=1 // pred_region
      %79 = dma.done [#allocation9], 512
    $region37: #{tpu_custom_call.1} parent=1 // pred_fallthru
      _
    // Predicated region
    $region38: #{tpu_custom_call.1} parent=1 // pred_check
      _
    $region39: #{tpu_custom_call.1} parent=1 // pred_check_branch
      %81 = sbr.rel (0) target = $region41
    $region40: #{tpu_custom_call.1} parent=1 // pred_region
      %82 = dma.done [#allocation9], 16
    $region41: #{tpu_custom_call.1} parent=1 // pred_fallthru
      _
    %v83 = vld [vmem:[#allocation2] sm:$0xff]
    %v84 = vld [vmem:[#allocation2 + $0x8] sm:$0xff]
    %85 = vadd.xlane.f32.xlu0 %v83
    %v86 = vpop.xlane.xlu0 %85
    %87 = vadd.xlane.f32.xlu0 %v84
    %v88 = vpop.xlane.xlu0 %87
    %v89 = vld [vmem:[#allocation5] sm:$0xff]
    %v90 = vld [vmem:[#allocation7] sm:$0x1]
    %v91 = vld [vmem:[#allocation8] sm:$0xff]
    %v92 = vld [vmem:[#allocation8 + $0x8] sm:$0xff]
    %v93 = vld [vmem:[#allocation8 + $0x10] sm:$0xff]
    %v94 = vld [vmem:[#allocation8 + $0x18] sm:$0xff]
    %v95 = vld [vmem:[#allocation10] sm:$0x1]
    %v96 = vmul.f32 %v86, 0.00390625
    %v97 = vmul.f32 %v88, 0.00390625
    %v99 = vlaneseq
    %v100 = vshrl.u32 %v99, 7
    %v101 = vsub.s32 0, %v100
    %v102 = vrot.slane %v90, %v101
    %v106 = vlaneseq
    %v107 = vand.u32 %v106, 127
    %v108 = vlaneseq
    %v109 = vshrl.u32 %v108, 7
    %v110 = vsub.s32 %v107, %v109
    %v111 = vrot.slane %v96, %v110
    %v112 = vlaneseq
    %v113 = vshrl.u32 %v112, 7
    %v114 = vsub.s32 %v107, %v113
    %v115 = vrot.slane %v97, %v114
    %vm116 = vcmask 1041409
    %v117 = vsel %vm116, %v115, %v111
    %vm118 = vcmask 64512
    %v119 = vsel %vm118, %v117, 0
    %121 = vmatprep.subr.mxu0 0.0
    %122 = vmatpush1.msra.mxu0 %v89
    %123 = vmatprep.subr.mxu0 0.0
    %124 = vmatpush1.msra.mxu0 0.0
    %125 = vmatprep.subr.mxu0 0.0
    %126 = vmatpush1.msra.mxu0 0.0
    %127 = vmatprep.subr.mxu0 0.0
    %128 = vmatpush1.msra.mxu0 0.0
    %129 = vmatprep.subr.mxu0 0.0
    %130 = vmatpush1.msra.mxu0 0.0
    %131 = vmatprep.subr.mxu0 0.0
    %132 = vmatpush1.msra.mxu0 0.0
    %133 = vmatprep.subr.mxu0 0.0
    %134 = vmatpush1.msra.mxu0 0.0
    %135 = vmatprep.subr.mxu0 0.0
    %136 = vmatpush1.msra.mxu0 0.0
    %137 = vmatprep.subr.mxu0 0.0
    %138 = vmatpush1.msra.mxu0 0.0
    %139 = vmatprep.subr.mxu0 0.0
    %140 = vmatpush1.msra.mxu0 0.0
    %141 = vmatprep.subr.mxu0 0.0
    %142 = vmatpush1.msra.mxu0 0.0
    %143 = vmatprep.subr.mxu0 0.0
    %144 = vmatpush1.msra.mxu0 0.0
    %145 = vmatprep.subr.mxu0 0.0
    %146 = vmatpush1.msra.mxu0 0.0
    %147 = vmatprep.subr.mxu0 0.0
    %148 = vmatpush1.msra.mxu0 0.0
    %149 = vmatprep.subr.mxu0 0.0
    %150 = vmatpush1.msra.mxu0 0.0
    %151 = vmatprep.subr.mxu0 0.0
    %152 = vmatpush1.msra.mxu0 0.0
    %153 = vmatprep.subr.mxu0 0.0
    %154 = vmatpush1.msra.mxu0 0.0
    %155 = vmatprep.subr.mxu0 0.0
    %156 = vmatpush1.msra.mxu0 0.0
    %157 = vmatprep.subr.mxu0 0.0
    %158 = vmatpush1.msra.mxu0 0.0
    %159 = vmatprep.subr.mxu0 0.0
    %160 = vmatpush1.msra.mxu0 0.0
    %161 = vmatprep.subr.mxu0 0.0
    %162 = vmatpush1.msra.mxu0 0.0
    %163 = vmatprep.subr.mxu0 0.0
    %164 = vmatpush1.msra.mxu0 0.0
    %165 = vmatprep.subr.mxu0 0.0
    %166 = vmatpush1.msra.mxu0 0.0
    %167 = vmatprep.subr.mxu0 0.0
    %168 = vmatpush1.msra.mxu0 0.0
    %169 = vmatprep.subr.mxu0 0.0
    %170 = vmatpush1.msra.mxu0 0.0
    %171 = vmatprep.subr.mxu0 0.0
    %172 = vmatpush1.msra.mxu0 0.0
    %173 = vmatprep.subr.mxu0 0.0
    %174 = vmatpush1.msra.mxu0 0.0
    %175 = vmatprep.subr.mxu0 0.0
    %176 = vmatpush1.msra.mxu0 0.0
    %177 = vmatprep.subr.mxu0 0.0
    %178 = vmatpush1.msra.mxu0 0.0
    %179 = vmatprep.subr.mxu0 0.0
    %180 = vmatpush1.msra.mxu0 0.0
    %181 = vmatprep.subr.mxu0 0.0
    %182 = vmatpush1.msra.mxu0 0.0
    %183 = vmatprep.subr.mxu0 0.0
    %184 = vmatpush1.msra.mxu0 0.0
    %185 = vmatprep.mubr.f32.mxu0 0.0
    %186 = vmatmul.mubr.f32.gmra.mrb[0].mxu0 %v119
    %v187 = vpop.f32.mrb[0].mxu0
    %v188 = vadd.f32 %v102, %v187
    %v189 = vpop.f32.mrb[0].mxu0
    %190 = vdwg.mxu0
    %v191 = vmax.f32 %v188, 0.0
    %v193 = vlaneseq
    %v194 = vshrl.u32 %v193, 7
    %v195 = vsub.s32 0, %v194
    %v196 = vrot.slane %v95, %v195
    %vm198 = vcmask 261120
    %v200 = vsel %vm198, %v191, 0
    %202 = vmatprep.subr.mxu0 0.0
    %203 = vmatpush1.msra.mxu0 %v91
    %204 = vmatprep.subr.mxu0 0.0
    %205 = vmatpush1.msra.mxu0 %v92
    %206 = vmatprep.subr.mxu0 0.0
    %207 = vmatpush1.msra.mxu0 %v93
    %208 = vmatprep.subr.mxu0 0.0
    %209 = vmatpush1.msra.mxu0 %v94
    %210 = vmatprep.subr.mxu0 0.0
    %211 = vmatpush1.msra.mxu0 0.0
    %212 = vmatprep.subr.mxu0 0.0
    %213 = vmatpush1.msra.mxu0 0.0
    %214 = vmatprep.subr.mxu0 0.0
    %215 = vmatpush1.msra.mxu0 0.0
    %216 = vmatprep.subr.mxu0 0.0
    %217 = vmatpush1.msra.mxu0 0.0
    %218 = vmatprep.subr.mxu0 0.0
    %219 = vmatpush1.msra.mxu0 0.0
    %220 = vmatprep.subr.mxu0 0.0
    %221 = vmatpush1.msra.mxu0 0.0
    %222 = vmatprep.subr.mxu0 0.0
    %223 = vmatpush1.msra.mxu0 0.0
    %224 = vmatprep.subr.mxu0 0.0
    %225 = vmatpush1.msra.mxu0 0.0
    %226 = vmatprep.subr.mxu0 0.0
    %227 = vmatpush1.msra.mxu0 0.0
    %228 = vmatprep.subr.mxu0 0.0
    %229 = vmatpush1.msra.mxu0 0.0
    %230 = vmatprep.subr.mxu0 0.0
    %231 = vmatpush1.msra.mxu0 0.0
    %232 = vmatprep.subr.mxu0 0.0
    %233 = vmatpush1.msra.mxu0 0.0
    %234 = vmatprep.subr.mxu0 0.0
    %235 = vmatpush1.msra.mxu0 0.0
    %236 = vmatprep.subr.mxu0 0.0
    %237 = vmatpush1.msra.mxu0 0.0
    %238 = vmatprep.subr.mxu0 0.0
    %239 = vmatpush1.msra.mxu0 0.0
    %240 = vmatprep.subr.mxu0 0.0
    %241 = vmatpush1.msra.mxu0 0.0
    %242 = vmatprep.subr.mxu0 0.0
    %243 = vmatpush1.msra.mxu0 0.0
    %244 = vmatprep.subr.mxu0 0.0
    %245 = vmatpush1.msra.mxu0 0.0
    %246 = vmatprep.subr.mxu0 0.0
    %247 = vmatpush1.msra.mxu0 0.0
    %248 = vmatprep.subr.mxu0 0.0
    %249 = vmatpush1.msra.mxu0 0.0
    %250 = vmatprep.subr.mxu0 0.0
    %251 = vmatpush1.msra.mxu0 0.0
    %252 = vmatprep.subr.mxu0 0.0
    %253 = vmatpush1.msra.mxu0 0.0
    %254 = vmatprep.subr.mxu0 0.0
    %255 = vmatpush1.msra.mxu0 0.0
    %256 = vmatprep.subr.mxu0 0.0
    %257 = vmatpush1.msra.mxu0 0.0
    %258 = vmatprep.subr.mxu0 0.0
    %259 = vmatpush1.msra.mxu0 0.0
    %260 = vmatprep.subr.mxu0 0.0
    %261 = vmatpush1.msra.mxu0 0.0
    %262 = vmatprep.subr.mxu0 0.0
    %263 = vmatpush1.msra.mxu0 0.0
    %264 = vmatprep.subr.mxu0 0.0
    %265 = vmatpush1.msra.mxu0 0.0
    %266 = vmatprep.mubr.f32.mxu0 0.0
    %267 = vmatmul.mubr.f32.gmra.mrb[0].mxu0 %v200
    %v268 = vpop.f32.mrb[0].mxu0
    %v269 = vadd.f32 %v196, %v268
    %v270 = vpop.f32.mrb[0].mxu0
    %271 = vdwg.mxu0
    %272 = vst [vmem:[#allocation11] sm:$0x3] %v269
    // Predicated region
    $region42: #{tpu_custom_call.1} parent=1 // pred_check
      _
    $region43: #{tpu_custom_call.1} parent=1 // pred_check_branch
      %274 = sbr.rel (0) target = $region45
    $region44: #{tpu_custom_call.1} parent=1 // pred_region
      %s276 = ssub.s32 32, 32
      %277 = vsyncadd [#allocation4], %s276
      %s279 = sshll.u32 [#allocation11], 4
      %s280 = int_to_ptr.vmem [resolvable:$true] %s279
      %282 = dma.vmem_to_hbm [thread:$0]  %s280, 32, %s5, [#allocation4]
    $region45: #{tpu_custom_call.1} parent=1 // pred_fallthru
      _
    // Predicated region
    $region46: #{tpu_custom_call.1} parent=1 // pred_check
      _
    $region47: #{tpu_custom_call.1} parent=1 // pred_check_branch
      %284 = sbr.rel (0) target = $region49
    $region48: #{tpu_custom_call.1} parent=1 // pred_region
      %285 = dma.done [#allocation4], 32
    $region49: #{tpu_custom_call.1} parent=1 // pred_fallthru
      _
    %286 = vsyncpa [#allocation3], 1
    %287 = vsyncpa [#allocation6], 1
    %288 = vsyncpa [#allocation9], 1
    %289 = vsyncpa [#allocation4], 1

</llo_original>
